<compile_context>
chip_gen: v7x
topology: tpu7x:2x2x1
jax: 0.10.0
libtpu: 0.0.40
codegen_flags: <defaults>
</compile_context>

<pallas_src>
import math
import functools

import jax
import jax.numpy as jnp
from jax.experimental import pallas as pl
from jax.experimental.pallas import tpu as pltpu


def _round_up(a: int, b: int) -> int:
    return (a + b - 1) // b * b


# ----------------------------------------------------------------------------
# LoG kernel construction — verbatim port of the PyTorch log2d_kernel, including
# the original operator-precedence quirk `(x2 + y2 / 2 * s2)` and the
# `(1.0 / s4 * hg.sum())` scaling (intentionally faithful to the upstream source).
# Tiny (k x k) array -> plain JAX glue in the wrapper.
# ----------------------------------------------------------------------------
def log2d_kernel_weights(k: int, sigma: jnp.ndarray) -> jnp.ndarray:
    ax = jnp.round(
        jnp.linspace(-math.floor(k / 2), math.floor(k / 2), k)
    ).astype(jnp.float32)
    y = jnp.tile(ax.reshape(-1, 1), (1, k))
    x = jnp.tile(ax.reshape(1, -1), (k, 1))
    x2 = jnp.power(x, 2)
    y2 = jnp.power(y, 2)
    s2 = jnp.power(sigma, 2)       # sigma has shape (1,), broadcasts like torch
    s4 = jnp.power(sigma, 4)
    hg = jnp.exp(-(x2 + y2) / (2.0 * s2))
    kernel_t = hg * (1.0 - (x2 + y2 / 2 * s2)) * (1.0 / s4 * hg.sum())
    kernel = kernel_t - kernel_t.sum() / (float(k) ** 2)
    return kernel.astype(jnp.float32)          # (k, k)


# ----------------------------------------------------------------------------
# Pallas kernel: 'same'-size 2D conv of TN planes with a small (k x k) filter.
# ----------------------------------------------------------------------------
def _log2d_conv_kernel(w_ref, x_ref, o_ref, xz_ref, *, k, dilation, pad, h, w,
                       ro0, co0):
    # w_ref : (k, k) f32 LoG filter in SMEM (scalar reads).
    # x_ref : (TN, H, W) unpadded planes (input dtype) in VMEM.
    # o_ref : (TN, H, W) output block (input dtype) in VMEM.
    # xz_ref: (TN, ro0+H+pad, co0+W+pad) f32 scratch; the data interior lives at
    #         the tile-aligned offset (ro0, co0) so all stores start on an (8,128)
    #         tile boundary while the taps only do arbitrary-offset loads.
    tn = x_ref.shape[0]

    # Hoist the k*k scalar weight reads (and their scalar->vector broadcasts)
    # out of the tap loop and ahead of any VMEM traffic.
    wts = [[w_ref[u, v] for v in range(k)] for u in range(k)]

    # Fused zero-padding + f32 upcast (replaces the wrapper jnp.pad/astype HBM pass).
    if pad > 0:
        xz_ref[...] = jnp.zeros_like(xz_ref)
    xz_ref[:, ro0:ro0 + h, co0:co0 + w] = x_ref[...].astype(jnp.float32)

    # One windowed load of exactly the (H + 2*pad, W + 2*pad) region the taps need.
    xp = xz_ref[:, ro0 - pad:ro0 + h + pad, co0 - pad:co0 + w + pad]

    # Fully unrolled k*k shifted multiply-adds on the VPU (stride == 1 specialized;
    # dilation handled via static tap offsets). f32 accumulator.
    acc = jnp.zeros((tn, h, w), jnp.float32)
    for u in range(k):
        r0 = u * dilation
        for v in range(k):
            c0 = v * dilation
            acc = acc + wts[u][v] * xp[:, r0:r0 + h, c0:c0 + w]

    o_ref[...] = acc.astype(o_ref.dtype)


# ----------------------------------------------------------------------------
# LoG2d forward (matches nn.Module.forward, fixed_coeff=False semantics: the
# kernel is rebuilt from sigma each call, then conv2d on (B*C, 1, H, W)).
# ----------------------------------------------------------------------------
def log2d_forward(x, sigma, *, kernel_size, stride=1, padding=0, dilation=1):
    b, c, h, w = x.shape
    k = kernel_size

    h_out = (h + 2 * padding - dilation * (k - 1) - 1) // stride + 1
    w_out = (w + 2 * padding - dilation * (k - 1) - 1) // stride + 1
    # The PyTorch module views the conv output back to (b, c, h, w) => the conv
    # must preserve spatial dims, which also forces stride == 1 (the dead
    # strided-slice path from v1 has been removed per review).
    assert stride == 1, "LoG2d.forward requires stride=1 (output is viewed back to (b,c,h,w))"
    assert (h_out, w_out) == (h, w), "LoG2d.forward requires a 'same'-size convolution"

    weight = log2d_kernel_weights(k, sigma)          # (k, k) f32, rebuilt from sigma

    n = b * c
    xf = x.reshape(n, h, w)                          # free reshape; no pad/cast HBM pass

    # Tile-aligned interior offsets for the in-kernel zero-padded scratch.
    ro0 = _round_up(padding, 8) if padding > 0 else 0
    co0 = _round_up(padding, 128) if padding > 0 else 0
    ph = ro0 + h + padding
    pw = co0 + w + padding

    # ---- TN (planes per grid step): fill VMEM, but keep the grid >= 2 steps. ----
    itm = jnp.dtype(x.dtype).itemsize
    in_plane = _round_up(h, 8) * _round_up(w, 128) * itm       # physical VMEM bytes
    out_plane = in_plane
    pad_plane = _round_up(ph, 8) * _round_up(pw, 128) * 4
    per_plane = 2 * in_plane + 2 * out_plane + pad_plane       # double-buffered I/O + scratch
    budget = 20 * 1024 * 1024                                  # fits the 32 MiB scoped limit (v7x-safe)
    tn = int(max(1, min(n, budget // per_plane)))
    if n >= 2:
        tn = min(tn, -(-n // 2))                               # >= 2 grid steps -> feed both v7x cores
    grid = (pl.cdiv(n, tn),)

    kern = functools.partial(
        _log2d_conv_kernel,
        k=k, dilation=dilation, pad=padding, h=h, w=w, ro0=ro0, co0=co0,
    )

    out = pl.pallas_call(
        kern,
        out_shape=jax.ShapeDtypeStruct((n, h, w), x.dtype),
        grid=grid,
        in_specs=[
            pl.BlockSpec(memory_space=pltpu.MemorySpace.SMEM),   # (k, k) LoG filter
            pl.BlockSpec((tn, h, w), lambda i: (i, 0, 0)),       # TN unpadded planes
        ],
        out_specs=pl.BlockSpec((tn, h, w), lambda i: (i, 0, 0)),
        scratch_shapes=[pltpu.VMEM((tn, ph, pw), jnp.float32)],
        compiler_params=pltpu.CompilerParams(
            dimension_semantics=("parallel",),
            vmem_limit_bytes=32 * 1024 * 1024,                   # raise v5e's 16 MiB default; <= v7x physical
        ),
    )(weight, xf)

    return out.reshape(b, c, h, w)


if __name__ == "__main__":
    # Module config: in_channels=out_channels=4, kernel_size=3, stride=1,
    # padding=1, dilation=1, fixed_coeff=False (sigma ~ U(0.0001, 0.9999)).
    B, C, H, W = 2, 4, 16, 16
    K, STRIDE, PAD, DIL = 3, 1, 1, 1

    key = jax.random.PRNGKey(0)
    kx, ks = jax.random.split(key)
    x = jax.random.normal(kx, (B, C, H, W), dtype=jnp.float32)
    sigma = jax.random.uniform(
        ks, (1,), dtype=jnp.float32, minval=0.0001, maxval=0.9999
    )

    out = log2d_forward(
        x, sigma, kernel_size=K, stride=STRIDE, padding=PAD, dilation=DIL
    )
    out = jax.block_until_ready(out)

    # Reference check against XLA's conv (same math: conv2d on (B*C, 1, H, W)).
    weight = log2d_kernel_weights(K, sigma).reshape(1, 1, K, K)
    ref = jax.lax.conv_general_dilated(
        x.reshape(B * C, 1, H, W).astype(jnp.float32),
        weight,
        window_strides=(STRIDE, STRIDE),
        padding=[(PAD, PAD), (PAD, PAD)],
        rhs_dilation=(DIL, DIL),
        dimension_numbers=("NCHW", "OIHW", "NCHW"),
    ).reshape(B, C, H, W)

    scale = jnp.max(jnp.abs(ref)) + 1e-12
    rel_err = jnp.max(jnp.abs(out - ref)) / scale
    assert out.shape == (B, C, H, W)
    assert float(rel_err) < 1e-5, f"mismatch: rel_err={float(rel_err)}"

    print("KERNEL_OK")
</pallas_src>

<mosaic_0001>
module attributes {stable_mosaic.version = 11 : i64} {
  func.func @_log2d_conv_kernel(%arg0: i32, %arg1: memref<3x3xf32, #tpu.memory_space<smem>>, %arg2: memref<4x16x16xf32, #tpu.memory_space<vmem>>, %arg3: memref<4x16x16xf32, #tpu.memory_space<vmem>>, %arg4: memref<4x25x145xf32, #tpu.memory_space<vmem>>) attributes {dimension_semantics = [#tpu.dimension_semantics<parallel>], iteration_bounds = array<i64: 2>, scalar_prefetch = 0 : i64, scratch_operands = 1 : i64, tpu.core_type = #tpu.core_type<tc>, window_params = [{transform_indices = @transform_0, window_bounds = array<i64: 3, 3>}, {transform_indices = @transform_1, window_bounds = array<i64: 4, 16, 16>}, {transform_indices = @transform_2, window_bounds = array<i64: 4, 16, 16>}]} {
    %c0 = arith.constant 0 : index
    %c0_0 = arith.constant 0 : index
    %0 = memref.load %arg1[%c0, %c0_0] : memref<3x3xf32, #tpu.memory_space<smem>>
    %c0_1 = arith.constant 0 : index
    %c1 = arith.constant 1 : index
    %1 = memref.load %arg1[%c0_1, %c1] : memref<3x3xf32, #tpu.memory_space<smem>>
    %c0_2 = arith.constant 0 : index
    %c2 = arith.constant 2 : index
    %2 = memref.load %arg1[%c0_2, %c2] : memref<3x3xf32, #tpu.memory_space<smem>>
    %c1_3 = arith.constant 1 : index
    %c0_4 = arith.constant 0 : index
    %3 = memref.load %arg1[%c1_3, %c0_4] : memref<3x3xf32, #tpu.memory_space<smem>>
    %c1_5 = arith.constant 1 : index
    %c1_6 = arith.constant 1 : index
    %4 = memref.load %arg1[%c1_5, %c1_6] : memref<3x3xf32, #tpu.memory_space<smem>>
    %c1_7 = arith.constant 1 : index
    %c2_8 = arith.constant 2 : index
    %5 = memref.load %arg1[%c1_7, %c2_8] : memref<3x3xf32, #tpu.memory_space<smem>>
    %c2_9 = arith.constant 2 : index
    %c0_10 = arith.constant 0 : index
    %6 = memref.load %arg1[%c2_9, %c0_10] : memref<3x3xf32, #tpu.memory_space<smem>>
    %c2_11 = arith.constant 2 : index
    %c1_12 = arith.constant 1 : index
    %7 = memref.load %arg1[%c2_11, %c1_12] : memref<3x3xf32, #tpu.memory_space<smem>>
    %c2_13 = arith.constant 2 : index
    %c2_14 = arith.constant 2 : index
    %8 = memref.load %arg1[%c2_13, %c2_14] : memref<3x3xf32, #tpu.memory_space<smem>>
    %cst = arith.constant 0.000000e+00 : f32
    %9 = vector.broadcast %cst : f32 to vector<4x25x145xf32>
    %c0_15 = arith.constant 0 : index
    %c0_16 = arith.constant 0 : index
    %c0_17 = arith.constant 0 : index
    %10 = vector.load %arg4[%c0_15, %c0_16, %c0_17] : memref<4x25x145xf32, #tpu.memory_space<vmem>>, vector<4x25x145xf32>
    tpu.vector_store %arg4[%c0_15, %c0_16, %c0_17], %9 {strides = array<i32>} : memref<4x25x145xf32, #tpu.memory_space<vmem>>, vector<4x25x145xf32>,
    %c0_18 = arith.constant 0 : index
    %c0_19 = arith.constant 0 : index
    %c0_20 = arith.constant 0 : index
    %11 = vector.load %arg2[%c0_18, %c0_19, %c0_20] : memref<4x16x16xf32, #tpu.memory_space<vmem>>, vector<4x16x16xf32>
    %c0_21 = arith.constant 0 : index
    %c8 = arith.constant 8 : index
    %c128 = arith.constant 128 : index
    %12 = vector.load %arg4[%c0_21, %c8, %c128] : memref<4x25x145xf32, #tpu.memory_space<vmem>>, vector<4x16x16xf32>
    tpu.vector_store %arg4[%c0_21, %c8, %c128], %11 {strides = array<i32>} : memref<4x25x145xf32, #tpu.memory_space<vmem>>, vector<4x16x16xf32>,
    %c0_22 = arith.constant 0 : index
    %c7 = arith.constant 7 : index
    %c127 = arith.constant 127 : index
    %13 = vector.load %arg4[%c0_22, %c7, %c127] : memref<4x25x145xf32, #tpu.memory_space<vmem>>, vector<4x18x18xf32>
    %cst_23 = arith.constant 0.000000e+00 : f32
    %14 = vector.broadcast %cst_23 : f32 to vector<4x16x16xf32>
    %15 = vector.extract_strided_slice %13 {offsets = [0, 0, 0], sizes = [4, 16, 16], strides = [1, 1, 1]} : vector<4x18x18xf32> to vector<4x16x16xf32>
    %16 = vector.broadcast %0 : f32 to vector<4x16x16xf32>
    %17 = arith.mulf %16, %15 : vector<4x16x16xf32>
    %18 = arith.addf %14, %17 : vector<4x16x16xf32>
    %19 = vector.extract_strided_slice %13 {offsets = [0, 0, 1], sizes = [4, 16, 16], strides = [1, 1, 1]} : vector<4x18x18xf32> to vector<4x16x16xf32>
    %20 = vector.broadcast %1 : f32 to vector<4x16x16xf32>
    %21 = arith.mulf %20, %19 : vector<4x16x16xf32>
    %22 = arith.addf %18, %21 : vector<4x16x16xf32>
    %23 = vector.extract_strided_slice %13 {offsets = [0, 0, 2], sizes = [4, 16, 16], strides = [1, 1, 1]} : vector<4x18x18xf32> to vector<4x16x16xf32>
    %24 = vector.broadcast %2 : f32 to vector<4x16x16xf32>
    %25 = arith.mulf %24, %23 : vector<4x16x16xf32>
    %26 = arith.addf %22, %25 : vector<4x16x16xf32>
    %27 = vector.extract_strided_slice %13 {offsets = [0, 1, 0], sizes = [4, 16, 16], strides = [1, 1, 1]} : vector<4x18x18xf32> to vector<4x16x16xf32>
    %28 = vector.broadcast %3 : f32 to vector<4x16x16xf32>
    %29 = arith.mulf %28, %27 : vector<4x16x16xf32>
    %30 = arith.addf %26, %29 : vector<4x16x16xf32>
    %31 = vector.extract_strided_slice %13 {offsets = [0, 1, 1], sizes = [4, 16, 16], strides = [1, 1, 1]} : vector<4x18x18xf32> to vector<4x16x16xf32>
    %32 = vector.broadcast %4 : f32 to vector<4x16x16xf32>
    %33 = arith.mulf %32, %31 : vector<4x16x16xf32>
    %34 = arith.addf %30, %33 : vector<4x16x16xf32>
    %35 = vector.extract_strided_slice %13 {offsets = [0, 1, 2], sizes = [4, 16, 16], strides = [1, 1, 1]} : vector<4x18x18xf32> to vector<4x16x16xf32>
    %36 = vector.broadcast %5 : f32 to vector<4x16x16xf32>
    %37 = arith.mulf %36, %35 : vector<4x16x16xf32>
    %38 = arith.addf %34, %37 : vector<4x16x16xf32>
    %39 = vector.extract_strided_slice %13 {offsets = [0, 2, 0], sizes = [4, 16, 16], strides = [1, 1, 1]} : vector<4x18x18xf32> to vector<4x16x16xf32>
    %40 = vector.broadcast %6 : f32 to vector<4x16x16xf32>
    %41 = arith.mulf %40, %39 : vector<4x16x16xf32>
    %42 = arith.addf %38, %41 : vector<4x16x16xf32>
    %43 = vector.extract_strided_slice %13 {offsets = [0, 2, 1], sizes = [4, 16, 16], strides = [1, 1, 1]} : vector<4x18x18xf32> to vector<4x16x16xf32>
    %44 = vector.broadcast %7 : f32 to vector<4x16x16xf32>
    %45 = arith.mulf %44, %43 : vector<4x16x16xf32>
    %46 = arith.addf %42, %45 : vector<4x16x16xf32>
    %47 = vector.extract_strided_slice %13 {offsets = [0, 2, 2], sizes = [4, 16, 16], strides = [1, 1, 1]} : vector<4x18x18xf32> to vector<4x16x16xf32>
    %48 = vector.broadcast %8 : f32 to vector<4x16x16xf32>
    %49 = arith.mulf %48, %47 : vector<4x16x16xf32>
    %50 = arith.addf %46, %49 : vector<4x16x16xf32>
    %c0_24 = arith.constant 0 : index
    %c0_25 = arith.constant 0 : index
    %c0_26 = arith.constant 0 : index
    %51 = vector.load %arg3[%c0_24, %c0_25, %c0_26] : memref<4x16x16xf32, #tpu.memory_space<vmem>>, vector<4x16x16xf32>
    tpu.vector_store %arg3[%c0_24, %c0_25, %c0_26], %50 {strides = array<i32>} : memref<4x16x16xf32, #tpu.memory_space<vmem>>, vector<4x16x16xf32>,
    return
  }
  func.func @transform_0(%arg0: i32) -> (i32, i32) {
    %c0_i32 = arith.constant 0 : i32
    %c0_i32_0 = arith.constant 0 : i32
    %c0_i32_1 = arith.constant 0 : i32
    return %c0_i32, %c0_i32_0 : i32, i32
  }
  func.func @transform_1(%arg0: i32) -> (i32, i32, i32) {
    %c0_i32 = arith.constant 0 : i32
    %c0_i32_0 = arith.constant 0 : i32
    %c0_i32_1 = arith.constant 0 : i32
    return %arg0, %c0_i32, %c0_i32_0 : i32, i32, i32
  }
  func.func @transform_2(%arg0: i32) -> (i32, i32, i32) {
    %c0_i32 = arith.constant 0 : i32
    %c0_i32_0 = arith.constant 0 : i32
    %c0_i32_1 = arith.constant 0 : i32
    return %arg0, %c0_i32, %c0_i32_0 : i32, i32, i32
  }
}

</mosaic_0001>

<llo_original>
// kernel: tpu_custom_call.1
$region0: #{tpu_custom_call.1}
  #allocation0 [shape = 'u32[]', space=smem, size = 0x4, offset = 0x4, fixed_abs, tag = 'smem constant byte address 0x4 - core index']
  #allocation1 [shape = 'u32[144,128]{1,0:T(1,128)}', space=vmem, size = 0x12000, scoped, tag = 'internal scratch']
  #allocation2 [shape = 'f32[4,25,145]{2,1,0:T(8,128)}', space=vmem, size = 0x20000, scoped, tag = 'scratch operand']
  %s0 = inlined_call_operand.hbm [shape: f32[3,3], index: 0, kind: input, shape index: {}]
  %s1 = inlined_call_operand.hbm [shape: f32[8,16,16], index: 1, kind: input, shape index: {}]
  %s2 = inlined_call_operand.hbm [shape: f32[8,16,16], index: 2, kind: output, shape index: {}]
  %s3 = sld [smem:[#allocation0]]
  $region49: #{tpu_custom_call.1} parent=0
    _
  %s5 = ssub.s32 1, %s3
  %s6 = scalar_select 0, %s5, %s3
  $region1: #{tpu_custom_call.1} parent=0
    #allocation3 [shape = 'u8[2048]{0}', space=smem, size = 0x800, scoped, tag = 'input window, operand 0, single buffered']
    #allocation4 [shape = 's32[2]{0}', space=sflag, size = 0x8, scoped, tag = 'scoped memory for tpu_custom_call.1']
    #allocation5 [shape = 's32[2]{0}', space=sflag, size = 0x8, scoped, tag = 'scoped memory for tpu_custom_call.1']
    #allocation6 [shape = 's32[2]{0}', space=sflag, size = 0x8, scoped, tag = 'scoped memory for tpu_custom_call.1']
    #allocation7 [shape = 'u8[65536]{0}', space=vmem, size = 0x10000, scoped, tag = 'input window, operand 1']
    #allocation8 [shape = 'u8[65536]{0}', space=vmem, size = 0x10000, scoped, tag = 'output window, operand 0']
    %7 = vsyncpa [#allocation6], 0
    %8 = vsyncpa [#allocation4], 0
    %s9 = scalar_lea.sflag [#allocation4], 1
    %10 = vsyncpa %s9, 0
    %11 = vsyncpa [#allocation5], 0
    %s12 = scalar_lea.sflag [#allocation5], 1
    %13 = vsyncpa %s12, 0
    loop: start=0, step=1, limit=4
    $region2: #{tpu_custom_call.1} parent=1 // loop_pre_header
      _
    $region3: #{tpu_custom_call.1} parent=1 // loop_header
      %s15 = sphi 0, %s19
      %p16 = scmp.ge.s32.totalorder %s15, 4
      %s23 = sphi 0, %s23
      %s25 = sphi 0, %s23
      %s26 = sphi 0, %s25
      %s40 = sphi 0, %s26
      %s46 = sphi 0, %s48
      %s49 = sphi 0, %s46
      %s50 = sphi 0, %s49
      %s66 = sphi 0, %s50
      %s72 = sphi 0, %s74
      %s75 = sphi 0, %s72
      %s76 = sphi 0, %s75
      %s92 = sphi 0, %s76
    $region4: #{tpu_custom_call.1} parent=1 // loop_header_branch
      %18 = sbr.rel (%p16) target = $region8
    $region5: #{tpu_custom_call.1} parent=1 // loop_body
      %s20 = ssub.s32 %s15, 1
      %s21 = ssub.s32 %s15, 2
      %s22 = sadd.s32 %s15, 1
      %s24 = sadd.s32 %s23, 1
      %p27 = scmp.eq.s32.totalorder %s15, 1
      %p28 = scmp.ne.s32.totalorder %s23, %s25
      %p29 = scmp.eq.s32.totalorder %s15, 0
      %p30 = por %p28, %p29
      %p31 = scmp.ne.s32.totalorder %s23, %s25
      %p32 = scmp.eq.s32.totalorder %s20, 1
      %p33 = por %p31, %p32
      %p34 = scmp.ne.s32.totalorder %s25, %s26
      %p35 = scmp.eq.s32.totalorder %s20, 0
      %p36 = por %p34, %p35
      %p37 = scmp.ne.s32.totalorder %s25, %s26
      %p38 = scmp.eq.s32.totalorder %s21, 1
      %p39 = por %p37, %p38
      %p41 = scmp.ne.s32.totalorder %s26, %s40
      %p42 = scmp.eq.s32.totalorder %s21, 0
      %p43 = por %p41, %p42
      %s44 = ssub.s32 %s15, %s22
      %p45 = scmp.eq.s32.totalorder %s44, 0
      %s47 = sadd.s32 %s46, 1
      %s48 = scalar_select %p45, %s46, %s47
      %p51 = pneg %p45
      %p52 = scmp.eq.s32.totalorder %s15, 1
      %p53 = por %p51, %p52
      %p54 = scmp.ne.s32.totalorder %s46, %s49
      %p55 = scmp.eq.s32.totalorder %s15, 0
      %p56 = por %p54, %p55
      %p57 = scmp.ne.s32.totalorder %s46, %s49
      %p58 = scmp.eq.s32.totalorder %s20, 1
      %p59 = por %p57, %p58
      %p60 = scmp.ne.s32.totalorder %s49, %s50
      %p61 = scmp.eq.s32.totalorder %s20, 0
      %p62 = por %p60, %p61
      %p63 = scmp.ne.s32.totalorder %s49, %s50
      %p64 = scmp.eq.s32.totalorder %s21, 1
      %p65 = por %p63, %p64
      %p67 = scmp.ne.s32.totalorder %s50, %s66
      %p68 = scmp.eq.s32.totalorder %s21, 0
      %p69 = por %p67, %p68
      %s70 = ssub.s32 %s15, %s22
      %p71 = scmp.eq.s32.totalorder %s70, 0
      %s73 = sadd.s32 %s72, 1
      %s74 = scalar_select %p71, %s72, %s73
      %p77 = pneg %p71
      %p78 = scmp.eq.s32.totalorder %s15, 1
      %p79 = por %p77, %p78
      %p80 = scmp.ne.s32.totalorder %s72, %s75
      %p81 = scmp.eq.s32.totalorder %s15, 0
      %p82 = por %p80, %p81
      %p83 = scmp.ne.s32.totalorder %s72, %s75
      %p84 = scmp.eq.s32.totalorder %s20, 1
      %p85 = por %p83, %p84
      %p86 = scmp.ne.s32.totalorder %s75, %s76
      %p87 = scmp.eq.s32.totalorder %s20, 0
      %p88 = por %p86, %p87
      %p89 = scmp.ne.s32.totalorder %s75, %s76
      %p90 = scmp.eq.s32.totalorder %s21, 1
      %p91 = por %p89, %p90
      %p93 = scmp.ne.s32.totalorder %s76, %s92
      %p94 = scmp.eq.s32.totalorder %s21, 0
      %p95 = por %p93, %p94
      %p96 = scmp.le.s32.totalorder 1, %s15
      %p97 = scmp.lt.s32.totalorder %s15, 3
      %p98 = pnand %p96, %p97
      %p99 = pneg %p98
      // Predicated region
      $region9: #{tpu_custom_call.1} parent=5 // pred_check
        _
      $region10: #{tpu_custom_call.1} parent=5 // pred_check_branch
        %101 = sbr.rel (%p98) target = $region12
      $region11: #{tpu_custom_call.1} parent=5 // pred_region
        %s102 = ssub.s32 %s15, 1
        // Predicated region
        $region13: #{tpu_custom_call.1} parent=11 // pred_check
          %p103 = pneg %p36
        $region14: #{tpu_custom_call.1} parent=11 // pred_check_branch
          %105 = sbr.rel (%p103) target = $region16
        $region15: #{tpu_custom_call.1} parent=11 // pred_region
          %s107 = ssub.s32 64, 64
          %108 = vsyncadd [#allocation6], %s107
          %111 = dma.hbm_to_smem %s0, 64, [#allocation3], [#allocation6]
        $region16: #{tpu_custom_call.1} parent=11 // pred_fallthru
          _
      $region12: #{tpu_custom_call.1} parent=5 // pred_fallthru
        _
      %p112 = scmp.lt.s32.totalorder %s15, 2
      // Predicated region
      $region17: #{tpu_custom_call.1} parent=5 // pred_check
        %p113 = pneg %p112
      $region18: #{tpu_custom_call.1} parent=5 // pred_check_branch
        %115 = sbr.rel (%p113) target = $region20
      $region19: #{tpu_custom_call.1} parent=5 // pred_region
        // Predicated region
        $region21: #{tpu_custom_call.1} parent=19 // pred_check
          %p116 = pneg %p56
        $region22: #{tpu_custom_call.1} parent=19 // pred_check_branch
          %118 = sbr.rel (%p116) target = $region24
        $region23: #{tpu_custom_call.1} parent=19 // pred_region
          %s119 = sand.u32 %s46, 1
          %s120 = scalar_lea.sflag [#allocation4], %s119
          %s121 = sand.u32 %s46, 1
          %s122 = smul.addr %s121, 64
          %s123 = scalar_lea.vmem [#allocation7], %s122
          %s124 = smul.u32 4, %s15
          %s126 = ssub.s32 1024, 1024
          %127 = vsyncadd %s120, %s126
          %s128 = smul.addr %s124, 2
          %s129 = smul.addr %s128, 128
          %s130 = scalar_lea.hbm %s1, %s129
          %s131 = sshll.u32 %s123, 4
          %s132 = int_to_ptr.vmem [resolvable:$true] %s131
          %137 = dma.hbm_to_vmem [thread:$0]  %s130, 1024, %s132, %s120, 128, 128, 8
        $region24: #{tpu_custom_call.1} parent=19 // pred_fallthru
          _
      $region20: #{tpu_custom_call.1} parent=5 // pred_fallthru
        _
      %p138 = scmp.le.s32.totalorder 1, %s15
      %p139 = scmp.lt.s32.totalorder %s15, 3
      %p140 = pnand %p138, %p139
      %p141 = pneg %p140
      // Predicated region
      $region25: #{tpu_custom_call.1} parent=5 // pred_check
        _
      $region26: #{tpu_custom_call.1} parent=5 // pred_check_branch
        %143 = sbr.rel (%p140) target = $region28
      $region27: #{tpu_custom_call.1} parent=5 // pred_region
        %s144 = ssub.s32 %s15, 1
        // Predicated region
        $region29: #{tpu_custom_call.1} parent=27 // pred_check
          %p145 = pneg %p36
        $region30: #{tpu_custom_call.1} parent=27 // pred_check_branch
          %147 = sbr.rel (%p145) target = $region32
        $region31: #{tpu_custom_call.1} parent=27 // pred_region
          %148 = dma.done [#allocation6], 64
        $region32: #{tpu_custom_call.1} parent=27 // pred_fallthru
          _
        %s149 = sand.u32 %s49, 1
        %s150 = scalar_lea.sflag [#allocation4], %s149
        %s151 = sand.u32 %s49, 1
        %s152 = smul.addr %s151, 64
        %s153 = scalar_lea.vmem [#allocation7], %s152
        // Predicated region
        $region33: #{tpu_custom_call.1} parent=27 // pred_check
          %p154 = pneg %p62
        $region34: #{tpu_custom_call.1} parent=27 // pred_check_branch
          %156 = sbr.rel (%p154) target = $region36
        $region35: #{tpu_custom_call.1} parent=27 // pred_region
          %157 = dma.done %s150, 1024
        $region36: #{tpu_custom_call.1} parent=27 // pred_fallthru
          _
        %158 = sfence
        %p159 = pneg %p36
        %p160 = pneg %p33
        %s161 = sand.u32 %s49, 1
        %s162 = scalar_lea.sflag [#allocation4], %s161
        %s163 = sand.u32 %s49, 1
        %s164 = smul.addr %s163, 64
        %s165 = scalar_lea.vmem [#allocation7], %s164
        %p166 = pneg %p62
        %p167 = pneg %p59
        %p168 = pneg %p88
        %p169 = pneg %p85
        %s170 = sand.u32 %s75, 1
        %s171 = scalar_lea.sflag [#allocation5], %s170
        %s172 = sand.u32 %s75, 1
        %s173 = smul.addr %s172, 64
        %s174 = scalar_lea.vmem [#allocation8], %s173
        %s175 = smul.u32 4, %s20
        %s176 = smul.u32 4, %s20
        %s177 = sld [smem:[#allocation3]]
        %s178 = sld [smem:[#allocation3 + $0x1]]
        %s179 = sld [smem:[#allocation3 + $0x2]]
        %s180 = sld [smem:[#allocation3 + $0x80]]
        %s181 = sld [smem:[#allocation3 + $0x81]]
        %s182 = sld [smem:[#allocation3 + $0x82]]
        %s183 = sld [smem:[#allocation3 + $0x100]]
        %s184 = sld [smem:[#allocation3 + $0x101]]
        %s185 = sld [smem:[#allocation3 + $0x102]]
        %186 = vst [vmem:[#allocation2] sm:$0xff] 0.0
        %vm187 = vcmask 138240
        %188 = vst.msk [vmem:[#allocation2 + $0x8] sm:$0xff] %vm187, 0.0
        %189 = vst [vmem:[#allocation2 + $0x10] sm:$0xff] 0.0
        %190 = vst.msk [vmem:[#allocation2 + $0x18] sm:$0xff] %vm187, 0.0
        %191 = vst [vmem:[#allocation2 + $0x20] sm:$0xff] 0.0
        %192 = vst.msk [vmem:[#allocation2 + $0x28] sm:$0xff] %vm187, 0.0
        %193 = vst [vmem:[#allocation2 + $0x30] sm:$0x1] 0.0
        %vm194 = vcmask 131072
        %195 = vst.msk [vmem:[#allocation2 + $0x38] sm:$0x1] %vm194, 0.0
        %196 = vst [vmem:[#allocation2 + $0x40] sm:$0xff] 0.0
        %197 = vst.msk [vmem:[#allocation2 + $0x48] sm:$0xff] %vm187, 0.0
        %198 = vst [vmem:[#allocation2 + $0x50] sm:$0xff] 0.0
        %199 = vst.msk [vmem:[#allocation2 + $0x58] sm:$0xff] %vm187, 0.0
        %200 = vst [vmem:[#allocation2 + $0x60] sm:$0xff] 0.0
        %201 = vst.msk [vmem:[#allocation2 + $0x68] sm:$0xff] %vm187, 0.0
        %202 = vst [vmem:[#allocation2 + $0x70] sm:$0x1] 0.0
        %203 = vst.msk [vmem:[#allocation2 + $0x78] sm:$0x1] %vm194, 0.0
        %204 = vst [vmem:[#allocation2 + $0x80] sm:$0xff] 0.0
        %205 = vst.msk [vmem:[#allocation2 + $0x88] sm:$0xff] %vm187, 0.0
        %206 = vst [vmem:[#allocation2 + $0x90] sm:$0xff] 0.0
        %207 = vst.msk [vmem:[#allocation2 + $0x98] sm:$0xff] %vm187, 0.0
        %208 = vst [vmem:[#allocation2 + $0xa0] sm:$0xff] 0.0
        %209 = vst.msk [vmem:[#allocation2 + $0xa8] sm:$0xff] %vm187, 0.0
        %210 = vst [vmem:[#allocation2 + $0xb0] sm:$0x1] 0.0
        %211 = vst.msk [vmem:[#allocation2 + $0xb8] sm:$0x1] %vm194, 0.0
        %212 = vst [vmem:[#allocation2 + $0xc0] sm:$0xff] 0.0
        %213 = vst.msk [vmem:[#allocation2 + $0xc8] sm:$0xff] %vm187, 0.0
        %214 = vst [vmem:[#allocation2 + $0xd0] sm:$0xff] 0.0
        %215 = vst.msk [vmem:[#allocation2 + $0xd8] sm:$0xff] %vm187, 0.0
        %216 = vst [vmem:[#allocation2 + $0xe0] sm:$0xff] 0.0
        %217 = vst.msk [vmem:[#allocation2 + $0xe8] sm:$0xff] %vm187, 0.0
        %218 = vst [vmem:[#allocation2 + $0xf0] sm:$0x1] 0.0
        %219 = vst.msk [vmem:[#allocation2 + $0xf8] sm:$0x1] %vm194, 0.0
        %v220 = vld [vmem:[%s153] sm:$0xff]
        %v221 = vld [vmem:[%s153 + $0x8] sm:$0xff]
        %v222 = vld [vmem:[%s153 + $0x10] sm:$0xff]
        %v223 = vld [vmem:[%s153 + $0x18] sm:$0xff]
        %v224 = vld [vmem:[%s153 + $0x20] sm:$0xff]
        %v225 = vld [vmem:[%s153 + $0x28] sm:$0xff]
        %v226 = vld [vmem:[%s153 + $0x30] sm:$0xff]
        %v227 = vld [vmem:[%s153 + $0x38] sm:$0xff]
        %vm228 = vcmask 130048
        %229 = vst.msk [vmem:[#allocation2 + $0x18] sm:$0xff] %vm228, %v220
        %230 = vst.msk [vmem:[#allocation2 + $0x28] sm:$0xff] %vm228, %v221
        %231 = vst.msk [vmem:[#allocation2 + $0x58] sm:$0xff] %vm228, %v222
        %232 = vst.msk [vmem:[#allocation2 + $0x68] sm:$0xff] %vm228, %v223
        %233 = vst.msk [vmem:[#allocation2 + $0x98] sm:$0xff] %vm228, %v224
        %234 = vst.msk [vmem:[#allocation2 + $0xa8] sm:$0xff] %vm228, %v225
        %235 = vst.msk [vmem:[#allocation2 + $0xd8] sm:$0xff] %vm228, %v226
        %236 = vst.msk [vmem:[#allocation2 + $0xe8] sm:$0xff] %vm228, %v227
        %v237 = vld [vmem:[#allocation2] sm:$0x80]
        %v238 = vld [vmem:[#allocation2 + $0x8] sm:$0x80]
        %v239 = vld [vmem:[#allocation2 + $0x10] sm:$0xff]
        %v240 = vld [vmem:[#allocation2 + $0x18] sm:$0xff]
        %v241 = vld [vmem:[#allocation2 + $0x20] sm:$0xff]
        %v242 = vld [vmem:[#allocation2 + $0x28] sm:$0xff]
        %v243 = vld [vmem:[#allocation2 + $0x30] sm:$0x1]
        %v244 = vld [vmem:[#allocation2 + $0x38] sm:$0x1]
        %v245 = vld [vmem:[#allocation2 + $0x40] sm:$0x80]
        %v246 = vld [vmem:[#allocation2 + $0x48] sm:$0x80]
        %v247 = vld [vmem:[#allocation2 + $0x50] sm:$0xff]
        %v248 = vld [vmem:[#allocation2 + $0x58] sm:$0xff]
        %v249 = vld [vmem:[#allocation2 + $0x60] sm:$0xff]
        %v250 = vld [vmem:[#allocation2 + $0x68] sm:$0xff]
        %v251 = vld [vmem:[#allocation2 + $0x70] sm:$0x1]
        %v252 = vld [vmem:[#allocation2 + $0x78] sm:$0x1]
        %v253 = vld [vmem:[#allocation2 + $0x80] sm:$0x80]
        %v254 = vld [vmem:[#allocation2 + $0x88] sm:$0x80]
        %v255 = vld [vmem:[#allocation2 + $0x90] sm:$0xff]
        %v256 = vld [vmem:[#allocation2 + $0x98] sm:$0xff]
        %v257 = vld [vmem:[#allocation2 + $0xa0] sm:$0xff]
        %v258 = vld [vmem:[#allocation2 + $0xa8] sm:$0xff]
        %v259 = vld [vmem:[#allocation2 + $0xb0] sm:$0x1]
        %v260 = vld [vmem:[#allocation2 + $0xb8] sm:$0x1]
        %v261 = vld [vmem:[#allocation2 + $0xc0] sm:$0x80]
        %v262 = vld [vmem:[#allocation2 + $0xc8] sm:$0x80]
        %v263 = vld [vmem:[#allocation2 + $0xd0] sm:$0xff]
        %v264 = vld [vmem:[#allocation2 + $0xd8] sm:$0xff]
        %v265 = vld [vmem:[#allocation2 + $0xe0] sm:$0xff]
        %v266 = vld [vmem:[#allocation2 + $0xe8] sm:$0xff]
        %v267 = vld [vmem:[#allocation2 + $0xf0] sm:$0x1]
        %v268 = vld [vmem:[#allocation2 + $0xf8] sm:$0x1]
        %v269 = vstv %s177
        %v270 = vmul.f32 %v269, %v237
        %v271 = vmul.f32 %v269, %v238
        %v272 = vmul.f32 %v269, %v239
        %v273 = vmul.f32 %v269, %v240
        %v274 = vmul.f32 %v269, %v241
        %v275 = vmul.f32 %v269, %v242
        %v276 = vmul.f32 %v269, %v245
        %v277 = vmul.f32 %v269, %v246
        %v278 = vmul.f32 %v269, %v247
        %v279 = vmul.f32 %v269, %v248
        %v280 = vmul.f32 %v269, %v249
        %v281 = vmul.f32 %v269, %v250
        %v282 = vmul.f32 %v269, %v253
        %v283 = vmul.f32 %v269, %v254
        %v284 = vmul.f32 %v269, %v255
        %v285 = vmul.f32 %v269, %v256
        %v286 = vmul.f32 %v269, %v257
        %v287 = vmul.f32 %v269, %v258
        %v288 = vmul.f32 %v269, %v261
        %v289 = vmul.f32 %v269, %v262
        %v290 = vmul.f32 %v269, %v263
        %v291 = vmul.f32 %v269, %v264
        %v292 = vmul.f32 %v269, %v265
        %v293 = vmul.f32 %v269, %v266
        %v294 = vadd.f32 %v270, 0.0
        %v295 = vadd.f32 %v271, 0.0
        %v296 = vadd.f32 %v272, 0.0
        %v297 = vadd.f32 %v273, 0.0
        %v298 = vadd.f32 %v274, 0.0
        %v299 = vadd.f32 %v275, 0.0
        %v300 = vadd.f32 %v276, 0.0
        %v301 = vadd.f32 %v277, 0.0
        %v302 = vadd.f32 %v278, 0.0
        %v303 = vadd.f32 %v279, 0.0
        %v304 = vadd.f32 %v280, 0.0
        %v305 = vadd.f32 %v281, 0.0
        %v306 = vadd.f32 %v282, 0.0
        %v307 = vadd.f32 %v283, 0.0
        %v308 = vadd.f32 %v284, 0.0
        %v309 = vadd.f32 %v285, 0.0
        %v310 = vadd.f32 %v286, 0.0
        %v311 = vadd.f32 %v287, 0.0
        %v312 = vadd.f32 %v288, 0.0
        %v313 = vadd.f32 %v289, 0.0
        %v314 = vadd.f32 %v290, 0.0
        %v315 = vadd.f32 %v291, 0.0
        %v316 = vadd.f32 %v292, 0.0
        %v317 = vadd.f32 %v293, 0.0
        %v318 = vstv %s178
        %v319 = vmul.f32 %v318, %v238
        %v320 = vmul.f32 %v318, %v240
        %v321 = vmul.f32 %v318, %v242
        %v322 = vmul.f32 %v318, %v246
        %v323 = vmul.f32 %v318, %v248
        %v324 = vmul.f32 %v318, %v250
        %v325 = vmul.f32 %v318, %v254
        %v326 = vmul.f32 %v318, %v256
        %v327 = vmul.f32 %v318, %v258
        %v328 = vmul.f32 %v318, %v262
        %v329 = vmul.f32 %v318, %v264
        %v330 = vmul.f32 %v318, %v266
        %343 = vrot.lane.b32.xlu0 %v319, 127
        %v344 = vpop.permute.xlu0 %343
        %345 = vrot.lane.b32.xlu0 %v320, 127
        %v346 = vpop.permute.xlu0 %345
        %347 = vrot.lane.b32.xlu0 %v321, 127
        %v348 = vpop.permute.xlu0 %347
        %349 = vrot.lane.b32.xlu0 %v322, 127
        %v350 = vpop.permute.xlu0 %349
        %351 = vrot.lane.b32.xlu0 %v323, 127
        %v352 = vpop.permute.xlu0 %351
        %353 = vrot.lane.b32.xlu0 %v324, 127
        %v354 = vpop.permute.xlu0 %353
        %355 = vrot.lane.b32.xlu0 %v325, 127
        %v356 = vpop.permute.xlu0 %355
        %357 = vrot.lane.b32.xlu0 %v326, 127
        %v358 = vpop.permute.xlu0 %357
        %359 = vrot.lane.b32.xlu0 %v327, 127
        %v360 = vpop.permute.xlu0 %359
        %361 = vrot.lane.b32.xlu0 %v328, 127
        %v362 = vpop.permute.xlu0 %361
        %363 = vrot.lane.b32.xlu0 %v329, 127
        %v364 = vpop.permute.xlu0 %363
        %365 = vrot.lane.b32.xlu0 %v330, 127
        %v366 = vpop.permute.xlu0 %365
        %v379 = vadd.f32 %v294, %v344
        %v380 = vadd.f32 %v295, %v344
        %v381 = vadd.f32 %v296, %v346
        %v382 = vadd.f32 %v297, %v346
        %v383 = vadd.f32 %v298, %v348
        %v384 = vadd.f32 %v299, %v348
        %v385 = vadd.f32 %v300, %v350
        %v386 = vadd.f32 %v301, %v350
        %v387 = vadd.f32 %v302, %v352
        %v388 = vadd.f32 %v303, %v352
        %v389 = vadd.f32 %v304, %v354
        %v390 = vadd.f32 %v305, %v354
        %v391 = vadd.f32 %v306, %v356
        %v392 = vadd.f32 %v307, %v356
        %v393 = vadd.f32 %v308, %v358
        %v394 = vadd.f32 %v309, %v358
        %v395 = vadd.f32 %v310, %v360
        %v396 = vadd.f32 %v311, %v360
        %v397 = vadd.f32 %v312, %v362
        %v398 = vadd.f32 %v313, %v362
        %v399 = vadd.f32 %v314, %v364
        %v400 = vadd.f32 %v315, %v364
        %v401 = vadd.f32 %v316, %v366
        %v402 = vadd.f32 %v317, %v366
        %v403 = vstv %s179
        %v404 = vmul.f32 %v403, %v238
        %v405 = vmul.f32 %v403, %v240
        %v406 = vmul.f32 %v403, %v242
        %v407 = vmul.f32 %v403, %v246
        %v408 = vmul.f32 %v403, %v248
        %v409 = vmul.f32 %v403, %v250
        %v410 = vmul.f32 %v403, %v254
        %v411 = vmul.f32 %v403, %v256
        %v412 = vmul.f32 %v403, %v258
        %v413 = vmul.f32 %v403, %v262
        %v414 = vmul.f32 %v403, %v264
        %v415 = vmul.f32 %v403, %v266
        %428 = vrot.lane.b32.xlu0 %v404, 126
        %v429 = vpop.permute.xlu0 %428
        %430 = vrot.lane.b32.xlu0 %v405, 126
        %v431 = vpop.permute.xlu0 %430
        %432 = vrot.lane.b32.xlu0 %v406, 126
        %v433 = vpop.permute.xlu0 %432
        %434 = vrot.lane.b32.xlu0 %v407, 126
        %v435 = vpop.permute.xlu0 %434
        %436 = vrot.lane.b32.xlu0 %v408, 126
        %v437 = vpop.permute.xlu0 %436
        %438 = vrot.lane.b32.xlu0 %v409, 126
        %v439 = vpop.permute.xlu0 %438
        %440 = vrot.lane.b32.xlu0 %v410, 126
        %v441 = vpop.permute.xlu0 %440
        %442 = vrot.lane.b32.xlu0 %v411, 126
        %v443 = vpop.permute.xlu0 %442
        %444 = vrot.lane.b32.xlu0 %v412, 126
        %v445 = vpop.permute.xlu0 %444
        %446 = vrot.lane.b32.xlu0 %v413, 126
        %v447 = vpop.permute.xlu0 %446
        %448 = vrot.lane.b32.xlu0 %v414, 126
        %v449 = vpop.permute.xlu0 %448
        %450 = vrot.lane.b32.xlu0 %v415, 126
        %v451 = vpop.permute.xlu0 %450
        %v464 = vadd.f32 %v379, %v429
        %v465 = vadd.f32 %v380, %v429
        %v466 = vadd.f32 %v381, %v431
        %v467 = vadd.f32 %v382, %v431
        %v468 = vadd.f32 %v383, %v433
        %v469 = vadd.f32 %v384, %v433
        %v470 = vadd.f32 %v385, %v435
        %v471 = vadd.f32 %v386, %v435
        %v472 = vadd.f32 %v387, %v437
        %v473 = vadd.f32 %v388, %v437
        %v474 = vadd.f32 %v389, %v439
        %v475 = vadd.f32 %v390, %v439
        %v476 = vadd.f32 %v391, %v441
        %v477 = vadd.f32 %v392, %v441
        %v478 = vadd.f32 %v393, %v443
        %v479 = vadd.f32 %v394, %v443
        %v480 = vadd.f32 %v395, %v445
        %v481 = vadd.f32 %v396, %v445
        %v482 = vadd.f32 %v397, %v447
        %v483 = vadd.f32 %v398, %v447
        %v484 = vadd.f32 %v399, %v449
        %v485 = vadd.f32 %v400, %v449
        %v486 = vadd.f32 %v401, %v451
        %v487 = vadd.f32 %v402, %v451
        %v488 = vstv %s180
        %v489 = vmul.f32 %v488, %v239
        %v490 = vmul.f32 %v488, %v240
        %v491 = vmul.f32 %v488, %v241
        %v492 = vmul.f32 %v488, %v242
        %v493 = vmul.f32 %v488, %v247
        %v494 = vmul.f32 %v488, %v248
        %v495 = vmul.f32 %v488, %v249
        %v496 = vmul.f32 %v488, %v250
        %v497 = vmul.f32 %v488, %v255
        %v498 = vmul.f32 %v488, %v256
        %v499 = vmul.f32 %v488, %v257
        %v500 = vmul.f32 %v488, %v258
        %v501 = vmul.f32 %v488, %v263
        %v502 = vmul.f32 %v488, %v264
        %v503 = vmul.f32 %v488, %v265
        %v504 = vmul.f32 %v488, %v266
        %vm521 = vcmask 1046528
        %v522 = vrot.slane %v489, 1
        %v523 = vrot.slane %v490, 1
        %v524 = vrot.slane %v491, 1
        %v525 = vsel %vm521, %v522, %v524
        %v526 = vrot.slane %v492, 1
        %v527 = vsel %vm521, %v523, %v526
        %v528 = vrot.slane %v493, 1
        %v529 = vrot.slane %v494, 1
        %v530 = vrot.slane %v495, 1
        %v531 = vsel %vm521, %v528, %v530
        %v532 = vrot.slane %v496, 1
        %v533 = vsel %vm521, %v529, %v532
        %v534 = vrot.slane %v497, 1
        %v535 = vrot.slane %v498, 1
        %v536 = vrot.slane %v499, 1
        %v537 = vsel %vm521, %v534, %v536
        %v538 = vrot.slane %v500, 1
        %v539 = vsel %vm521, %v535, %v538
        %v540 = vrot.slane %v501, 1
        %v541 = vrot.slane %v502, 1
        %v542 = vrot.slane %v503, 1
        %v543 = vsel %vm521, %v540, %v542
        %v544 = vrot.slane %v504, 1
        %v545 = vsel %vm521, %v541, %v544
        %v570 = vadd.f32 %v464, %v522
        %v571 = vadd.f32 %v465, %v523
        %v572 = vadd.f32 %v466, %v525
        %v573 = vadd.f32 %v467, %v527
        %v574 = vadd.f32 %v468, %v524
        %v575 = vadd.f32 %v469, %v526
        %v576 = vadd.f32 %v470, %v528
        %v577 = vadd.f32 %v471, %v529
        %v578 = vadd.f32 %v472, %v531
        %v579 = vadd.f32 %v473, %v533
        %v580 = vadd.f32 %v474, %v530
        %v581 = vadd.f32 %v475, %v532
        %v582 = vadd.f32 %v476, %v534
        %v583 = vadd.f32 %v477, %v535
        %v584 = vadd.f32 %v478, %v537
        %v585 = vadd.f32 %v479, %v539
        %v586 = vadd.f32 %v480, %v536
        %v587 = vadd.f32 %v481, %v538
        %v588 = vadd.f32 %v482, %v540
        %v589 = vadd.f32 %v483, %v541
        %v590 = vadd.f32 %v484, %v543
        %v591 = vadd.f32 %v485, %v545
        %v592 = vadd.f32 %v486, %v542
        %v593 = vadd.f32 %v487, %v544
        %v594 = vstv %s181
        %v595 = vmul.f32 %v594, %v240
        %v596 = vmul.f32 %v594, %v242
        %v597 = vmul.f32 %v594, %v248
        %v598 = vmul.f32 %v594, %v250
        %v599 = vmul.f32 %v594, %v256
        %v600 = vmul.f32 %v594, %v258
        %v601 = vmul.f32 %v594, %v264
        %v602 = vmul.f32 %v594, %v266
        %v611 = vrot.slane %v595, 1
        %v612 = vrot.slane %v596, 1
        %v613 = vsel %vm521, %v611, %v612
        %v614 = vrot.slane %v597, 1
        %v615 = vrot.slane %v598, 1
        %v616 = vsel %vm521, %v614, %v615
        %v617 = vrot.slane %v599, 1
        %v618 = vrot.slane %v600, 1
        %v619 = vsel %vm521, %v617, %v618
        %v620 = vrot.slane %v601, 1
        %v621 = vrot.slane %v602, 1
        %v622 = vsel %vm521, %v620, %v621
        %623 = vrot.lane.b32.xlu0 %v611, 127
        %v624 = vpop.permute.xlu0 %623
        %625 = vrot.lane.b32.xlu0 %v613, 127
        %v626 = vpop.permute.xlu0 %625
        %627 = vrot.lane.b32.xlu0 %v612, 127
        %v628 = vpop.permute.xlu0 %627
        %629 = vrot.lane.b32.xlu0 %v614, 127
        %v630 = vpop.permute.xlu0 %629
        %631 = vrot.lane.b32.xlu0 %v616, 127
        %v632 = vpop.permute.xlu0 %631
        %633 = vrot.lane.b32.xlu0 %v615, 127
        %v634 = vpop.permute.xlu0 %633
        %635 = vrot.lane.b32.xlu0 %v617, 127
        %v636 = vpop.permute.xlu0 %635
        %637 = vrot.lane.b32.xlu0 %v619, 127
        %v638 = vpop.permute.xlu0 %637
        %639 = vrot.lane.b32.xlu0 %v618, 127
        %v640 = vpop.permute.xlu0 %639
        %641 = vrot.lane.b32.xlu0 %v620, 127
        %v642 = vpop.permute.xlu0 %641
        %643 = vrot.lane.b32.xlu0 %v622, 127
        %v644 = vpop.permute.xlu0 %643
        %645 = vrot.lane.b32.xlu0 %v621, 127
        %v646 = vpop.permute.xlu0 %645
        %v659 = vadd.f32 %v570, %v624
        %v660 = vadd.f32 %v571, %v624
        %v661 = vadd.f32 %v572, %v626
        %v662 = vadd.f32 %v573, %v626
        %v663 = vadd.f32 %v574, %v628
        %v664 = vadd.f32 %v575, %v628
        %v665 = vadd.f32 %v576, %v630
        %v666 = vadd.f32 %v577, %v630
        %v667 = vadd.f32 %v578, %v632
        %v668 = vadd.f32 %v579, %v632
        %v669 = vadd.f32 %v580, %v634
        %v670 = vadd.f32 %v581, %v634
        %v671 = vadd.f32 %v582, %v636
        %v672 = vadd.f32 %v583, %v636
        %v673 = vadd.f32 %v584, %v638
        %v674 = vadd.f32 %v585, %v638
        %v675 = vadd.f32 %v586, %v640
        %v676 = vadd.f32 %v587, %v640
        %v677 = vadd.f32 %v588, %v642
        %v678 = vadd.f32 %v589, %v642
        %v679 = vadd.f32 %v590, %v644
        %v680 = vadd.f32 %v591, %v644
        %v681 = vadd.f32 %v592, %v646
        %v682 = vadd.f32 %v593, %v646
        %v683 = vstv %s182
        %v684 = vmul.f32 %v683, %v240
        %v685 = vmul.f32 %v683, %v242
        %v686 = vmul.f32 %v683, %v248
        %v687 = vmul.f32 %v683, %v250
        %v688 = vmul.f32 %v683, %v256
        %v689 = vmul.f32 %v683, %v258
        %v690 = vmul.f32 %v683, %v264
        %v691 = vmul.f32 %v683, %v266
        %v700 = vrot.slane %v684, 1
        %v701 = vrot.slane %v685, 1
        %v702 = vsel %vm521, %v700, %v701
        %v703 = vrot.slane %v686, 1
        %v704 = vrot.slane %v687, 1
        %v705 = vsel %vm521, %v703, %v704
        %v706 = vrot.slane %v688, 1
        %v707 = vrot.slane %v689, 1
        %v708 = vsel %vm521, %v706, %v707
        %v709 = vrot.slane %v690, 1
        %v710 = vrot.slane %v691, 1
        %v711 = vsel %vm521, %v709, %v710
        %712 = vrot.lane.b32.xlu0 %v700, 126
        %v713 = vpop.permute.xlu0 %712
        %714 = vrot.lane.b32.xlu0 %v702, 126
        %v715 = vpop.permute.xlu0 %714
        %716 = vrot.lane.b32.xlu0 %v701, 126
        %v717 = vpop.permute.xlu0 %716
        %718 = vrot.lane.b32.xlu0 %v703, 126
        %v719 = vpop.permute.xlu0 %718
        %720 = vrot.lane.b32.xlu0 %v705, 126
        %v721 = vpop.permute.xlu0 %720
        %722 = vrot.lane.b32.xlu0 %v704, 126
        %v723 = vpop.permute.xlu0 %722
        %724 = vrot.lane.b32.xlu0 %v706, 126
        %v725 = vpop.permute.xlu0 %724
        %726 = vrot.lane.b32.xlu0 %v708, 126
        %v727 = vpop.permute.xlu0 %726
        %728 = vrot.lane.b32.xlu0 %v707, 126
        %v729 = vpop.permute.xlu0 %728
        %730 = vrot.lane.b32.xlu0 %v709, 126
        %v731 = vpop.permute.xlu0 %730
        %732 = vrot.lane.b32.xlu0 %v711, 126
        %v733 = vpop.permute.xlu0 %732
        %734 = vrot.lane.b32.xlu0 %v710, 126
        %v735 = vpop.permute.xlu0 %734
        %v748 = vadd.f32 %v659, %v713
        %v749 = vadd.f32 %v660, %v713
        %v750 = vadd.f32 %v661, %v715
        %v751 = vadd.f32 %v662, %v715
        %v752 = vadd.f32 %v663, %v717
        %v753 = vadd.f32 %v664, %v717
        %v754 = vadd.f32 %v665, %v719
        %v755 = vadd.f32 %v666, %v719
        %v756 = vadd.f32 %v667, %v721
        %v757 = vadd.f32 %v668, %v721
        %v758 = vadd.f32 %v669, %v723
        %v759 = vadd.f32 %v670, %v723
        %v760 = vadd.f32 %v671, %v725
        %v761 = vadd.f32 %v672, %v725
        %v762 = vadd.f32 %v673, %v727
        %v763 = vadd.f32 %v674, %v727
        %v764 = vadd.f32 %v675, %v729
        %v765 = vadd.f32 %v676, %v729
        %v766 = vadd.f32 %v677, %v731
        %v767 = vadd.f32 %v678, %v731
        %v768 = vadd.f32 %v679, %v733
        %v769 = vadd.f32 %v680, %v733
        %v770 = vadd.f32 %v681, %v735
        %v771 = vadd.f32 %v682, %v735
        %v772 = vstv %s183
        %v773 = vmul.f32 %v772, %v239
        %v774 = vmul.f32 %v772, %v240
        %v775 = vmul.f32 %v772, %v241
        %v776 = vmul.f32 %v772, %v242
        %v777 = vmul.f32 %v772, %v243
        %v778 = vmul.f32 %v772, %v244
        %v779 = vmul.f32 %v772, %v247
        %v780 = vmul.f32 %v772, %v248
        %v781 = vmul.f32 %v772, %v249
        %v782 = vmul.f32 %v772, %v250
        %v783 = vmul.f32 %v772, %v251
        %v784 = vmul.f32 %v772, %v252
        %v785 = vmul.f32 %v772, %v255
        %v786 = vmul.f32 %v772, %v256
        %v787 = vmul.f32 %v772, %v257
        %v788 = vmul.f32 %v772, %v258
        %v789 = vmul.f32 %v772, %v259
        %v790 = vmul.f32 %v772, %v260
        %v791 = vmul.f32 %v772, %v263
        %v792 = vmul.f32 %v772, %v264
        %v793 = vmul.f32 %v772, %v265
        %v794 = vmul.f32 %v772, %v266
        %v795 = vmul.f32 %v772, %v267
        %v796 = vmul.f32 %v772, %v268
        %vm821 = vcmask 1045504
        %v822 = vrot.slane %v773, 2
        %v823 = vrot.slane %v774, 2
        %v824 = vrot.slane %v775, 2
        %v825 = vsel %vm821, %v822, %v824
        %v826 = vrot.slane %v776, 2
        %v827 = vsel %vm821, %v823, %v826
        %v828 = vrot.slane %v777, 2
        %v829 = vsel %vm821, %v824, %v828
        %v830 = vrot.slane %v778, 2
        %v831 = vsel %vm821, %v826, %v830
        %v832 = vrot.slane %v779, 2
        %v833 = vrot.slane %v780, 2
        %v834 = vrot.slane %v781, 2
        %v835 = vsel %vm821, %v832, %v834
        %v836 = vrot.slane %v782, 2
        %v837 = vsel %vm821, %v833, %v836
        %v838 = vrot.slane %v783, 2
        %v839 = vsel %vm821, %v834, %v838
        %v840 = vrot.slane %v784, 2
        %v841 = vsel %vm821, %v836, %v840
        %v842 = vrot.slane %v785, 2
        %v843 = vrot.slane %v786, 2
        %v844 = vrot.slane %v787, 2
        %v845 = vsel %vm821, %v842, %v844
        %v846 = vrot.slane %v788, 2
        %v847 = vsel %vm821, %v843, %v846
        %v848 = vrot.slane %v789, 2
        %v849 = vsel %vm821, %v844, %v848
        %v850 = vrot.slane %v790, 2
        %v851 = vsel %vm821, %v846, %v850
        %v852 = vrot.slane %v791, 2
        %v853 = vrot.slane %v792, 2
        %v854 = vrot.slane %v793, 2
        %v855 = vsel %vm821, %v852, %v854
        %v856 = vrot.slane %v794, 2
        %v857 = vsel %vm821, %v853, %v856
        %v858 = vrot.slane %v795, 2
        %v859 = vsel %vm821, %v854, %v858
        %v860 = vrot.slane %v796, 2
        %v861 = vsel %vm821, %v856, %v860
        %v886 = vadd.f32 %v748, %v822
        %v887 = vadd.f32 %v749, %v823
        %v888 = vadd.f32 %v750, %v825
        %v889 = vadd.f32 %v751, %v827
        %v890 = vadd.f32 %v752, %v829
        %v891 = vadd.f32 %v753, %v831
        %v892 = vadd.f32 %v754, %v832
        %v893 = vadd.f32 %v755, %v833
        %v894 = vadd.f32 %v756, %v835
        %v895 = vadd.f32 %v757, %v837
        %v896 = vadd.f32 %v758, %v839
        %v897 = vadd.f32 %v759, %v841
        %v898 = vadd.f32 %v760, %v842
        %v899 = vadd.f32 %v761, %v843
        %v900 = vadd.f32 %v762, %v845
        %v901 = vadd.f32 %v763, %v847
        %v902 = vadd.f32 %v764, %v849
        %v903 = vadd.f32 %v765, %v851
        %v904 = vadd.f32 %v766, %v852
        %v905 = vadd.f32 %v767, %v853
        %v906 = vadd.f32 %v768, %v855
        %v907 = vadd.f32 %v769, %v857
        %v908 = vadd.f32 %v770, %v859
        %v909 = vadd.f32 %v771, %v861
        %v910 = vstv %s184
        %v911 = vmul.f32 %v910, %v240
        %v912 = vmul.f32 %v910, %v242
        %v913 = vmul.f32 %v910, %v244
        %v914 = vmul.f32 %v910, %v248
        %v915 = vmul.f32 %v910, %v250
        %v916 = vmul.f32 %v910, %v252
        %v917 = vmul.f32 %v910, %v256
        %v918 = vmul.f32 %v910, %v258
        %v919 = vmul.f32 %v910, %v260
        %v920 = vmul.f32 %v910, %v264
        %v921 = vmul.f32 %v910, %v266
        %v922 = vmul.f32 %v910, %v268
        %v935 = vrot.slane %v911, 2
        %v936 = vrot.slane %v912, 2
        %v937 = vsel %vm821, %v935, %v936
        %v938 = vrot.slane %v913, 2
        %v939 = vsel %vm821, %v936, %v938
        %v940 = vrot.slane %v914, 2
        %v941 = vrot.slane %v915, 2
        %v942 = vsel %vm821, %v940, %v941
        %v943 = vrot.slane %v916, 2
        %v944 = vsel %vm821, %v941, %v943
        %v945 = vrot.slane %v917, 2
        %v946 = vrot.slane %v918, 2
        %v947 = vsel %vm821, %v945, %v946
        %v948 = vrot.slane %v919, 2
        %v949 = vsel %vm821, %v946, %v948
        %v950 = vrot.slane %v920, 2
        %v951 = vrot.slane %v921, 2
        %v952 = vsel %vm821, %v950, %v951
        %v953 = vrot.slane %v922, 2
        %v954 = vsel %vm821, %v951, %v953
        %955 = vrot.lane.b32.xlu0 %v935, 127
        %v956 = vpop.permute.xlu0 %955
        %957 = vrot.lane.b32.xlu0 %v937, 127
        %v958 = vpop.permute.xlu0 %957
        %959 = vrot.lane.b32.xlu0 %v939, 127
        %v960 = vpop.permute.xlu0 %959
        %961 = vrot.lane.b32.xlu0 %v940, 127
        %v962 = vpop.permute.xlu0 %961
        %963 = vrot.lane.b32.xlu0 %v942, 127
        %v964 = vpop.permute.xlu0 %963
        %965 = vrot.lane.b32.xlu0 %v944, 127
        %v966 = vpop.permute.xlu0 %965
        %967 = vrot.lane.b32.xlu0 %v945, 127
        %v968 = vpop.permute.xlu0 %967
        %969 = vrot.lane.b32.xlu0 %v947, 127
        %v970 = vpop.permute.xlu0 %969
        %971 = vrot.lane.b32.xlu0 %v949, 127
        %v972 = vpop.permute.xlu0 %971
        %973 = vrot.lane.b32.xlu0 %v950, 127
        %v974 = vpop.permute.xlu0 %973
        %975 = vrot.lane.b32.xlu0 %v952, 127
        %v976 = vpop.permute.xlu0 %975
        %977 = vrot.lane.b32.xlu0 %v954, 127
        %v978 = vpop.permute.xlu0 %977
        %v991 = vadd.f32 %v886, %v956
        %v992 = vadd.f32 %v887, %v956
        %v993 = vadd.f32 %v888, %v958
        %v994 = vadd.f32 %v889, %v958
        %v995 = vadd.f32 %v890, %v960
        %v996 = vadd.f32 %v891, %v960
        %v997 = vadd.f32 %v892, %v962
        %v998 = vadd.f32 %v893, %v962
        %v999 = vadd.f32 %v894, %v964
        %v1000 = vadd.f32 %v895, %v964
        %v1001 = vadd.f32 %v896, %v966
        %v1002 = vadd.f32 %v897, %v966
        %v1003 = vadd.f32 %v898, %v968
        %v1004 = vadd.f32 %v899, %v968
        %v1005 = vadd.f32 %v900, %v970
        %v1006 = vadd.f32 %v901, %v970
        %v1007 = vadd.f32 %v902, %v972
        %v1008 = vadd.f32 %v903, %v972
        %v1009 = vadd.f32 %v904, %v974
        %v1010 = vadd.f32 %v905, %v974
        %v1011 = vadd.f32 %v906, %v976
        %v1012 = vadd.f32 %v907, %v976
        %v1013 = vadd.f32 %v908, %v978
        %v1014 = vadd.f32 %v909, %v978
        %v1015 = vstv %s185
        %v1016 = vmul.f32 %v1015, %v240
        %v1017 = vmul.f32 %v1015, %v242
        %v1018 = vmul.f32 %v1015, %v244
        %v1019 = vmul.f32 %v1015, %v248
        %v1020 = vmul.f32 %v1015, %v250
        %v1021 = vmul.f32 %v1015, %v252
        %v1022 = vmul.f32 %v1015, %v256
        %v1023 = vmul.f32 %v1015, %v258
        %v1024 = vmul.f32 %v1015, %v260
        %v1025 = vmul.f32 %v1015, %v264
        %v1026 = vmul.f32 %v1015, %v266
        %v1027 = vmul.f32 %v1015, %v268
        %v1040 = vrot.slane %v1016, 2
        %v1041 = vrot.slane %v1017, 2
        %v1042 = vsel %vm821, %v1040, %v1041
        %v1043 = vrot.slane %v1018, 2
        %v1044 = vsel %vm821, %v1041, %v1043
        %v1045 = vrot.slane %v1019, 2
        %v1046 = vrot.slane %v1020, 2
        %v1047 = vsel %vm821, %v1045, %v1046
        %v1048 = vrot.slane %v1021, 2
        %v1049 = vsel %vm821, %v1046, %v1048
        %v1050 = vrot.slane %v1022, 2
        %v1051 = vrot.slane %v1023, 2
        %v1052 = vsel %vm821, %v1050, %v1051
        %v1053 = vrot.slane %v1024, 2
        %v1054 = vsel %vm821, %v1051, %v1053
        %v1055 = vrot.slane %v1025, 2
        %v1056 = vrot.slane %v1026, 2
        %v1057 = vsel %vm821, %v1055, %v1056
        %v1058 = vrot.slane %v1027, 2
        %v1059 = vsel %vm821, %v1056, %v1058
        %1060 = vrot.lane.b32.xlu0 %v1040, 126
        %v1061 = vpop.permute.xlu0 %1060
        %1062 = vrot.lane.b32.xlu0 %v1042, 126
        %v1063 = vpop.permute.xlu0 %1062
        %1064 = vrot.lane.b32.xlu0 %v1044, 126
        %v1065 = vpop.permute.xlu0 %1064
        %1066 = vrot.lane.b32.xlu0 %v1045, 126
        %v1067 = vpop.permute.xlu0 %1066
        %1068 = vrot.lane.b32.xlu0 %v1047, 126
        %v1069 = vpop.permute.xlu0 %1068
        %1070 = vrot.lane.b32.xlu0 %v1049, 126
        %v1071 = vpop.permute.xlu0 %1070
        %1072 = vrot.lane.b32.xlu0 %v1050, 126
        %v1073 = vpop.permute.xlu0 %1072
        %1074 = vrot.lane.b32.xlu0 %v1052, 126
        %v1075 = vpop.permute.xlu0 %1074
        %1076 = vrot.lane.b32.xlu0 %v1054, 126
        %v1077 = vpop.permute.xlu0 %1076
        %1078 = vrot.lane.b32.xlu0 %v1055, 126
        %v1079 = vpop.permute.xlu0 %1078
        %1080 = vrot.lane.b32.xlu0 %v1057, 126
        %v1081 = vpop.permute.xlu0 %1080
        %1082 = vrot.lane.b32.xlu0 %v1059, 126
        %v1083 = vpop.permute.xlu0 %1082
        %v1096 = vadd.f32 %v991, %v1061
        %v1097 = vadd.f32 %v992, %v1061
        %v1098 = vadd.f32 %v993, %v1063
        %v1099 = vadd.f32 %v994, %v1063
        %v1100 = vadd.f32 %v995, %v1065
        %v1101 = vadd.f32 %v996, %v1065
        %v1102 = vadd.f32 %v997, %v1067
        %v1103 = vadd.f32 %v998, %v1067
        %v1104 = vadd.f32 %v999, %v1069
        %v1105 = vadd.f32 %v1000, %v1069
        %v1106 = vadd.f32 %v1001, %v1071
        %v1107 = vadd.f32 %v1002, %v1071
        %v1108 = vadd.f32 %v1003, %v1073
        %v1109 = vadd.f32 %v1004, %v1073
        %v1110 = vadd.f32 %v1005, %v1075
        %v1111 = vadd.f32 %v1006, %v1075
        %v1112 = vadd.f32 %v1007, %v1077
        %v1113 = vadd.f32 %v1008, %v1077
        %v1114 = vadd.f32 %v1009, %v1079
        %v1115 = vadd.f32 %v1010, %v1079
        %v1116 = vadd.f32 %v1011, %v1081
        %v1117 = vadd.f32 %v1012, %v1081
        %v1118 = vadd.f32 %v1013, %v1083
        %v1119 = vadd.f32 %v1014, %v1083
        %1144 = vrot.lane.b32.xlu0 %v1096, 1
        %v1145 = vpop.permute.xlu0 %1144
        %1146 = vrot.lane.b32.xlu0 %v1097, 1
        %v1147 = vpop.permute.xlu0 %1146
        %1148 = vrot.lane.b32.xlu0 %v1098, 1
        %v1149 = vpop.permute.xlu0 %1148
        %1150 = vrot.lane.b32.xlu0 %v1099, 1
        %v1151 = vpop.permute.xlu0 %1150
        %1152 = vrot.lane.b32.xlu0 %v1100, 1
        %v1153 = vpop.permute.xlu0 %1152
        %1154 = vrot.lane.b32.xlu0 %v1101, 1
        %v1155 = vpop.permute.xlu0 %1154
        %1156 = vrot.lane.b32.xlu0 %v1102, 1
        %v1157 = vpop.permute.xlu0 %1156
        %1158 = vrot.lane.b32.xlu0 %v1103, 1
        %v1159 = vpop.permute.xlu0 %1158
        %1160 = vrot.lane.b32.xlu0 %v1104, 1
        %v1161 = vpop.permute.xlu0 %1160
        %1162 = vrot.lane.b32.xlu0 %v1105, 1
        %v1163 = vpop.permute.xlu0 %1162
        %1164 = vrot.lane.b32.xlu0 %v1106, 1
        %v1165 = vpop.permute.xlu0 %1164
        %1166 = vrot.lane.b32.xlu0 %v1107, 1
        %v1167 = vpop.permute.xlu0 %1166
        %1168 = vrot.lane.b32.xlu0 %v1108, 1
        %v1169 = vpop.permute.xlu0 %1168
        %1170 = vrot.lane.b32.xlu0 %v1109, 1
        %v1171 = vpop.permute.xlu0 %1170
        %1172 = vrot.lane.b32.xlu0 %v1110, 1
        %v1173 = vpop.permute.xlu0 %1172
        %1174 = vrot.lane.b32.xlu0 %v1111, 1
        %v1175 = vpop.permute.xlu0 %1174
        %1176 = vrot.lane.b32.xlu0 %v1112, 1
        %v1177 = vpop.permute.xlu0 %1176
        %1178 = vrot.lane.b32.xlu0 %v1113, 1
        %v1179 = vpop.permute.xlu0 %1178
        %1180 = vrot.lane.b32.xlu0 %v1114, 1
        %v1181 = vpop.permute.xlu0 %1180
        %1182 = vrot.lane.b32.xlu0 %v1115, 1
        %v1183 = vpop.permute.xlu0 %1182
        %1184 = vrot.lane.b32.xlu0 %v1116, 1
        %v1185 = vpop.permute.xlu0 %1184
        %1186 = vrot.lane.b32.xlu0 %v1117, 1
        %v1187 = vpop.permute.xlu0 %1186
        %1188 = vrot.lane.b32.xlu0 %v1118, 1
        %v1189 = vpop.permute.xlu0 %1188
        %1190 = vrot.lane.b32.xlu0 %v1119, 1
        %v1191 = vpop.permute.xlu0 %1190
        %vm1192 = vcmask 7168
        %v1193 = vsel %vm1192, %v1145, %v1147
        %v1194 = vsel %vm1192, %v1149, %v1151
        %v1195 = vsel %vm1192, %v1153, %v1155
        %v1196 = vsel %vm1192, %v1157, %v1159
        %v1197 = vsel %vm1192, %v1161, %v1163
        %v1198 = vsel %vm1192, %v1165, %v1167
        %v1199 = vsel %vm1192, %v1169, %v1171
        %v1200 = vsel %vm1192, %v1173, %v1175
        %v1201 = vsel %vm1192, %v1177, %v1179
        %v1202 = vsel %vm1192, %v1181, %v1183
        %v1203 = vsel %vm1192, %v1185, %v1187
        %v1204 = vsel %vm1192, %v1189, %v1191
        %vm1217 = vcmask 130055
        %1218 = vst.msk [vmem:[%s174 - $0x7] sm:$0x80] %vm1217, %v1193
        %1219 = vst.msk [vmem:[%s174 + $0x1] sm:$0xff] %vm228, %v1194
        %vm1220 = vcmask 129024
        %1221 = vst.msk [vmem:[%s174 + $0x9] sm:$0x7f] %vm1220, %v1195
        %1222 = vst.msk [vmem:[%s174 + $0x9] sm:$0x80] %vm1217, %v1196
        %1223 = vst.msk [vmem:[%s174 + $0x11] sm:$0xff] %vm228, %v1197
        %1224 = vst.msk [vmem:[%s174 + $0x19] sm:$0x7f] %vm1220, %v1198
        %1225 = vst.msk [vmem:[%s174 + $0x19] sm:$0x80] %vm1217, %v1199
        %1226 = vst.msk [vmem:[%s174 + $0x21] sm:$0xff] %vm228, %v1200
        %1227 = vst.msk [vmem:[%s174 + $0x29] sm:$0x7f] %vm1220, %v1201
        %1228 = vst.msk [vmem:[%s174 + $0x29] sm:$0x80] %vm1217, %v1202
        %1229 = vst.msk [vmem:[%s174 + $0x31] sm:$0xff] %vm228, %v1203
        %1230 = vst.msk [vmem:[%s174 + $0x39] sm:$0x7f] %vm1220, %v1204
        %s1231 = sand.u32 %s75, 1
        %s1232 = scalar_lea.sflag [#allocation5], %s1231
        %s1233 = sand.u32 %s75, 1
        %s1234 = smul.addr %s1233, 64
        %s1235 = scalar_lea.vmem [#allocation8], %s1234
        // Predicated region
        $region37: #{tpu_custom_call.1} parent=27 // pred_check
          %p1236 = pneg %p85
        $region38: #{tpu_custom_call.1} parent=27 // pred_check_branch
          %1238 = sbr.rel (%p1236) target = $region40
        $region39: #{tpu_custom_call.1} parent=27 // pred_region
          %s1239 = smul.u32 4, %s20
          %s1241 = ssub.s32 1024, 1024
          %1242 = vsyncadd %s1232, %s1241
          %s1243 = smul.addr %s1239, 2
          %s1244 = smul.addr %s1243, 128
          %s1245 = scalar_lea.hbm %s2, %s1244
          %s1246 = sshll.u32 %s1235, 4
          %s1247 = int_to_ptr.vmem [resolvable:$true] %s1246
          %1252 = dma.vmem_to_hbm [thread:$0]  %s1247, 1024, %s1245, %s1232, 128, 128, 8
        $region40: #{tpu_custom_call.1} parent=27 // pred_fallthru
          _
      $region28: #{tpu_custom_call.1} parent=5 // pred_fallthru
        _
      %p1253 = scmp.le.s32.totalorder 2, %s15
      // Predicated region
      $region41: #{tpu_custom_call.1} parent=5 // pred_check
        %p1254 = pneg %p1253
      $region42: #{tpu_custom_call.1} parent=5 // pred_check_branch
        %1256 = sbr.rel (%p1254) target = $region44
      $region43: #{tpu_custom_call.1} parent=5 // pred_region
        %s1257 = ssub.s32 %s15, 2
        // Predicated region
        $region45: #{tpu_custom_call.1} parent=43 // pred_check
          %p1258 = pneg %p91
        $region46: #{tpu_custom_call.1} parent=43 // pred_check_branch
          %1260 = sbr.rel (%p1258) target = $region48
        $region47: #{tpu_custom_call.1} parent=43 // pred_region
          %s1261 = sand.u32 %s76, 1
          %s1262 = scalar_lea.sflag [#allocation5], %s1261
          %s1263 = sand.u32 %s76, 1
          %s1264 = smul.addr %s1263, 64
          %s1265 = scalar_lea.vmem [#allocation8], %s1264
          %1266 = dma.done %s1262, 1024
        $region48: #{tpu_custom_call.1} parent=43 // pred_fallthru
          _
      $region44: #{tpu_custom_call.1} parent=5 // pred_fallthru
        _
    $region6: #{tpu_custom_call.1} parent=1 // loop_footer
      %s19 = sadd.s32 1, %s15
    $region7: #{tpu_custom_call.1} parent=1 // loop_footer_branch
      %14 = sbr.rel target = $region3
    $region8: #{tpu_custom_call.1} parent=1 // loop_exit
      _
    %1267 = vsyncpa [#allocation4], 1
    %s1268 = scalar_lea.sflag [#allocation4], 1
    %1269 = vsyncpa %s1268, 1
    %1270 = vsyncpa [#allocation5], 1
    %s1271 = scalar_lea.sflag [#allocation5], 1
    %1272 = vsyncpa %s1271, 1
    %1273 = vsyncpa [#allocation6], 1
    %s1274 = scalar_lea.sflag [#allocation6], 1
    %1275 = vsyncpa %s1274, 1

</llo_original>
